<compile_context>
chip_gen: v5e
topology: v5e:2x2
jax: 0.10.0
libtpu: 0.0.40
codegen_flags: <defaults>
</compile_context>

<pallas_src>
import functools

import jax
import jax.numpy as jnp
from jax.experimental import pallas as pl
from jax.experimental.pallas import tpu as pltpu


def _round_up(x, m):
    return (x + m - 1) // m * m


# ----------------------------------------------------------------------------
# Fused kernel: one [B, K] @ [K, N_pad] bf16 matmul (f32 accumulate) computes
# both heads into a single lane-dense output slab:
#   lanes [0, D)       -> linear head (bias + ReLU)
#   lanes [D, D+C)     -> pool head   (pooling columns pre-scaled by `scale`,
#                                      bias folded into b_fused; no ReLU)
#   lanes [D+C, N_pad) -> zero padding (zero weight cols + zero bias)
# ----------------------------------------------------------------------------
def _fused_heads_kernel(x_ref, w_ref, b_ref, o_ref, *, split):
    # bf16 operands, f32 accumulation on the MXU.
    acc = jnp.dot(x_ref[...], w_ref[...], preferred_element_type=jnp.float32)
    acc = acc + b_ref[...]  # f32 epilogue
    # ReLU only on the linear-head lanes [0, split); pool/pad lanes pass through.
    lane = jax.lax.broadcasted_iota(jnp.int32, acc.shape, dimension=1)
    out = jnp.where(lane < split, jnp.maximum(acc, 0.0), acc)
    o_ref[...] = out.astype(o_ref.dtype)


def fused_heads(x2d_bf16, w_fused_bf16, b_fused_f32, d_out):
    B, K = x2d_bf16.shape
    Kw, n_pad = w_fused_bf16.shape
    assert Kw == K and b_fused_f32.shape == (1, n_pad)

    kernel = functools.partial(_fused_heads_kernel, split=d_out)
    # Whole arrays resident in VMEM, no grid: nothing to pipeline at this size.
    # TODO(synk): for production B / K, switch to a B-"parallel" + K-"arbitrary"
    # grid with an f32 VMEM accumulator (pl.when init/finalize) and size the K
    # tile for v7x's 32 MiB scoped VMEM (BlockSpec double-buffers each input).
    return pl.pallas_call(
        kernel,
        out_shape=jax.ShapeDtypeStruct((B, n_pad), jnp.float32),
        in_specs=[
            pl.BlockSpec(memory_space=pltpu.MemorySpace.VMEM),
            pl.BlockSpec(memory_space=pltpu.MemorySpace.VMEM),
            pl.BlockSpec(memory_space=pltpu.MemorySpace.VMEM),
        ],
        out_specs=pl.BlockSpec(memory_space=pltpu.MemorySpace.VMEM),
    )(x2d_bf16, w_fused_bf16, b_fused_f32)


# ----------------------------------------------------------------------------
# Build the ConcatModels([LinearHead, PoolHead]) equivalent.
# Parameters live per-head (same semantics as the PyTorch modules); the fused
# weight/bias slabs are precomputed once at construction time.
# ----------------------------------------------------------------------------
def build_fused_concat_models(key, C, H, W, D):
    kw, kb, ks, kbias = jax.random.split(key, 4)
    K = C * H * W
    HW = H * W
    N = D + C
    n_pad = _round_up(N, 256)  # lane-dense + 128/256-multiple column tile

    # head_a (LinearHead) params
    w = jax.random.normal(kw, (K, D), jnp.float32) * (1.0 / jnp.sqrt(K))
    b = jax.random.normal(kb, (1, D), jnp.float32) * 0.01
    # head_b (PoolHead) params
    scale = jax.random.normal(ks, (C,), jnp.float32)
    bias = jax.random.normal(kbias, (C,), jnp.float32) * 0.1

    # Pooling matrix P[K, C]: column c has scale[c]/(H*W) over channel c's
    # H*W rows of the flattened NCHW input, zeros elsewhere.
    # NOTE: fine at C=4 / small H*W; for large C*H*W drop P from the matmul and
    # do the pool in-kernel (reshape to (B, C, H*W) + sum) to avoid DMA-ing a
    # mostly-zero slab.
    chan_ids = jnp.repeat(jnp.arange(C), HW)                        # [K]
    P = (chan_ids[:, None] == jnp.arange(C)[None, :]).astype(jnp.float32)
    P = P * (scale[None, :] / float(HW))                            # [K, C]

    w_fused = jnp.concatenate(
        [w, P, jnp.zeros((K, n_pad - N), jnp.float32)], axis=1)     # [K, n_pad]
    b_fused = jnp.concatenate(
        [b, bias[None, :], jnp.zeros((1, n_pad - N), jnp.float32)], axis=1)

    # bf16 operands (halve weight/activation HBM bytes, native MXU dtype);
    # kernel accumulates and applies bias/ReLU in f32.
    w_fused_bf16 = w_fused.astype(jnp.bfloat16)

    def forward(x):  # x: [B, C, H, W] -> {"head_a": [B, D], "head_b": [B, C]}
        B = x.shape[0]
        x2d = x.reshape(B, -1).astype(jnp.bfloat16)
        out = fused_heads(x2d, w_fused_bf16, b_fused, D)            # [B, n_pad] f32
        return {"head_a": out[:, :D], "head_b": out[:, D:D + C]}

    def reference(x):
        B = x.shape[0]
        x2d = x.reshape(B, -1)
        head_a = jnp.maximum(x2d @ w + b, 0.0)
        head_b = jnp.mean(x, axis=(2, 3)) * scale[None, :] + bias[None, :]
        return {"head_a": head_a, "head_b": head_b}

    return forward, reference


# ----------------------------------------------------------------------------
# ConcatModels container semantics: run each module on x, merge output dicts.
# (Here both heads are served by one fused module, i.e. one kernel launch.)
# ----------------------------------------------------------------------------
def concat_models_forward(module_fns, x):
    out = {}
    for fn in module_fns:
        out.update(fn(x))
    return out


if __name__ == "__main__":
    key = jax.random.PRNGKey(0)
    kx, kp = jax.random.split(key)

    B, C, H, W = 2, 4, 16, 16
    D = 128
    x = jax.random.normal(kx, (B, C, H, W), jnp.float32)

    fused_forward, fused_reference = build_fused_concat_models(kp, C, H, W, D)

    out = concat_models_forward([fused_forward], x)
    out = jax.tree_util.tree_map(jax.block_until_ready, out)

    # Pure-JAX f32 reference check.  Kernel uses bf16 MXU operands (f32
    # accumulate) and runs the pool mean through the MXU, so tolerance is a
    # bf16-level 2e-2 rather than exact-op comparison.
    ref_out = concat_models_forward([fused_reference], x)
    assert set(out.keys()) == {"head_a", "head_b"}
    assert out["head_a"].shape == (B, D)
    assert out["head_b"].shape == (B, C)
    for k in out:
        assert jnp.allclose(out[k], ref_out[k], atol=2e-2, rtol=2e-2), k

    print("KERNEL_OK")
</pallas_src>

<mosaic_0001>
module attributes {stable_mosaic.version = 11 : i64} {
  func.func @_fused_heads_kernel(%arg0: memref<2x1024xbf16, #tpu.memory_space<vmem>>, %arg1: memref<1024x256xbf16, #tpu.memory_space<vmem>>, %arg2: memref<1x256xf32, #tpu.memory_space<vmem>>, %arg3: memref<2x256xf32, #tpu.memory_space<vmem>>) attributes {dimension_semantics = [], scalar_prefetch = 0 : i64, scratch_operands = 0 : i64, tpu.core_type = #tpu.core_type<tc>} {
    %c0 = arith.constant 0 : index
    %c0_0 = arith.constant 0 : index
    %0 = vector.load %arg0[%c0, %c0_0] : memref<2x1024xbf16, #tpu.memory_space<vmem>>, vector<2x1024xbf16>
    %c0_1 = arith.constant 0 : index
    %c0_2 = arith.constant 0 : index
    %1 = vector.load %arg1[%c0_1, %c0_2] : memref<1024x256xbf16, #tpu.memory_space<vmem>>, vector<1024x256xbf16>
    %cst = arith.constant dense<0.000000e+00> : vector<2x256xf32>
    %2 = tpu.matmul %0, %1, %cst {dimension_numbers = #tpu.dot_dimension_numbers<[1], [0], [0], [1], [0, 0, 1, 1], [], []>} : vector<2x1024xbf16>, vector<1024x256xbf16>, vector<2x256xf32> -> vector<2x256xf32>
    %c0_3 = arith.constant 0 : index
    %c0_4 = arith.constant 0 : index
    %3 = vector.load %arg2[%c0_3, %c0_4] : memref<1x256xf32, #tpu.memory_space<vmem>>, vector<1x256xf32>
    %4 = vector.broadcast %3 : vector<1x256xf32> to vector<2x256xf32>
    %5 = arith.addf %2, %4 : vector<2x256xf32>
    %6 = tpu.iota {dimensions = array<i32: 1>} : vector<2x256xi32>
    %c128_i32 = arith.constant 128 : i32
    %7 = vector.broadcast %c128_i32 : i32 to vector<2x256xi32>
    %8 = arith.cmpi slt, %6, %7 : vector<2x256xi32>
    %cst_5 = arith.constant 0.000000e+00 : f32
    %9 = vector.broadcast %cst_5 : f32 to vector<2x256xf32>
    %10 = arith.maximumf %5, %9 : vector<2x256xf32>
    %11 = arith.select %8, %10, %5 : vector<2x256xi1>, vector<2x256xf32>
    %c0_6 = arith.constant 0 : index
    %c0_7 = arith.constant 0 : index
    %12 = vector.load %arg3[%c0_6, %c0_7] : memref<2x256xf32, #tpu.memory_space<vmem>>, vector<2x256xf32>
    tpu.vector_store %arg3[%c0_6, %c0_7], %11 {strides = array<i32>} : memref<2x256xf32, #tpu.memory_space<vmem>>, vector<2x256xf32>,
    return
  }
}

</mosaic_0001>

<llo_original>
// kernel: tpu_custom_call.1
$region0: #{tpu_custom_call.1}
  #allocation0 [shape = 'u32[]', space=smem, size = 0x4, offset = 0x4, fixed_abs, tag = 'smem constant byte address 0x4 - core index']
  #allocation1 [shape = 'u32[72,128]{1,0:T(1,128)}', space=vmem, size = 0x9000, scoped, tag = 'internal scratch']
  %s0 = inlined_call_operand.hbm [shape: bf16[2,1024], index: 0, kind: input, shape index: {}]
  %s1 = inlined_call_operand.hbm [shape: bf16[1024,256], index: 1, kind: input, shape index: {}]
  %s2 = inlined_call_operand.hbm [shape: f32[1,256], index: 2, kind: input, shape index: {}]
  %s3 = inlined_call_operand.hbm [shape: f32[2,256], index: 3, kind: output, shape index: {}]
  %s4 = sld [smem:[#allocation0]]
  $region34: #{tpu_custom_call.1} parent=0
    _
  %s6 = ssub.s32 1, %s4
  %s7 = scalar_select 0, %s6, %s4
  $region1: #{tpu_custom_call.1} parent=0
    #allocation2 [shape = 'u8[4096]{0}', space=vmem, size = 0x1000, scoped, tag = 'input window, operand 0, single buffered']
    #allocation3 [shape = 's32[1]{0}', space=sflag, size = 0x4, scoped, tag = 'scoped memory for tpu_custom_call.1']
    #allocation4 [shape = 's32[1]{0}', space=sflag, size = 0x4, scoped, tag = 'scoped memory for tpu_custom_call.1']
    #allocation5 [shape = 'u8[524288]{0}', space=vmem, size = 0x80000, scoped, tag = 'input window, operand 1, single buffered']
    #allocation6 [shape = 's32[1]{0}', space=sflag, size = 0x4, scoped, tag = 'scoped memory for tpu_custom_call.1']
    #allocation7 [shape = 'u8[1024]{0}', space=vmem, size = 0x400, scoped, tag = 'input window, operand 2, single buffered']
    #allocation8 [shape = 'u8[2048]{0}', space=vmem, size = 0x800, scoped, tag = 'output window, operand 0, single buffered']
    %8 = vsyncpa [#allocation3], 0
    %9 = vsyncpa [#allocation6], 0
    %10 = vsyncpa [#allocation4], 0
    // Predicated region
    $region2: #{tpu_custom_call.1} parent=1 // pred_check
      _
    $region3: #{tpu_custom_call.1} parent=1 // pred_check_branch
      %12 = sbr.rel (0) target = $region5
    $region4: #{tpu_custom_call.1} parent=1 // pred_region
      %14 = vsyncadd [#allocation3], 0
      %s16 = sshll.u32 %s0, 4
      %s17 = int_to_ptr.hbm [resolvable:$true] %s16
      %s18 = sshll.u32 [#allocation2], 4
      %s19 = int_to_ptr.vmem [resolvable:$true] %s18
      %21 = dma.hbm_to_vmem [thread:$0]  %s17, 128, %s19, [#allocation3]
    $region5: #{tpu_custom_call.1} parent=1 // pred_fallthru
      _
    // Predicated region
    $region6: #{tpu_custom_call.1} parent=1 // pred_check
      _
    $region7: #{tpu_custom_call.1} parent=1 // pred_check_branch
      %23 = sbr.rel (0) target = $region9
    $region8: #{tpu_custom_call.1} parent=1 // pred_region
      %25 = vsyncadd [#allocation6], 0
      %s26 = sshll.u32 %s1, 4
      %s27 = int_to_ptr.hbm [resolvable:$true] %s26
      %s28 = sshll.u32 [#allocation5], 4
      %s29 = int_to_ptr.vmem [resolvable:$true] %s28
      %34 = dma.hbm_to_vmem [thread:$0]  %s27, 16384, %s29, [#allocation6], 128, 128, 8
    $region9: #{tpu_custom_call.1} parent=1 // pred_fallthru
      _
    // Predicated region
    $region10: #{tpu_custom_call.1} parent=1 // pred_check
      _
    $region11: #{tpu_custom_call.1} parent=1 // pred_check_branch
      %36 = sbr.rel (0) target = $region13
    $region12: #{tpu_custom_call.1} parent=1 // pred_region
      %38 = vsyncadd [#allocation6], 0
      %s40 = sshll.u32 %s2, 4
      %s41 = int_to_ptr.hbm [resolvable:$true] %s40
      %s42 = sshll.u32 [#allocation7], 4
      %s43 = int_to_ptr.vmem [resolvable:$true] %s42
      %45 = dma.hbm_to_vmem [thread:$0]  %s41, 32, %s43, [#allocation6]
    $region13: #{tpu_custom_call.1} parent=1 // pred_fallthru
      _
    // Predicated region
    $region14: #{tpu_custom_call.1} parent=1 // pred_check
      _
    $region15: #{tpu_custom_call.1} parent=1 // pred_check_branch
      %47 = sbr.rel (0) target = $region17
    $region16: #{tpu_custom_call.1} parent=1 // pred_region
      %49 = dma.done [#allocation3], 128
    $region17: #{tpu_custom_call.1} parent=1 // pred_fallthru
      _
    // Predicated region
    $region18: #{tpu_custom_call.1} parent=1 // pred_check
      _
    $region19: #{tpu_custom_call.1} parent=1 // pred_check_branch
      %51 = sbr.rel (0) target = $region21
    $region20: #{tpu_custom_call.1} parent=1 // pred_region
      %53 = dma.done [#allocation6], 16384
    $region21: #{tpu_custom_call.1} parent=1 // pred_fallthru
      _
    // Predicated region
    $region22: #{tpu_custom_call.1} parent=1 // pred_check
      _
    $region23: #{tpu_custom_call.1} parent=1 // pred_check_branch
      %55 = sbr.rel (0) target = $region25
    $region24: #{tpu_custom_call.1} parent=1 // pred_region
      %57 = dma.done [#allocation6], 32
    $region25: #{tpu_custom_call.1} parent=1 // pred_fallthru
      _
    %v58 = vld [vmem:[#allocation2] sm:$0xff]
    %v59 = vld [vmem:[#allocation5] sm:$0xff]
    %v60 = vld [vmem:[#allocation5 + $0x8] sm:$0xff]
    %v61 = vld [vmem:[#allocation5 + $0x10] sm:$0xff]
    %v62 = vld [vmem:[#allocation5 + $0x18] sm:$0xff]
    %v63 = vld [vmem:[#allocation5 + $0x20] sm:$0xff]
    %v64 = vld [vmem:[#allocation5 + $0x28] sm:$0xff]
    %v65 = vld [vmem:[#allocation5 + $0x30] sm:$0xff]
    %v66 = vld [vmem:[#allocation5 + $0x38] sm:$0xff]
    %v67 = vld [vmem:[#allocation5 + $0x40] sm:$0xff]
    %v68 = vld [vmem:[#allocation5 + $0x48] sm:$0xff]
    %v69 = vld [vmem:[#allocation5 + $0x50] sm:$0xff]
    %v70 = vld [vmem:[#allocation5 + $0x58] sm:$0xff]
    %v71 = vld [vmem:[#allocation5 + $0x60] sm:$0xff]
    %v72 = vld [vmem:[#allocation5 + $0x68] sm:$0xff]
    %v73 = vld [vmem:[#allocation5 + $0x70] sm:$0xff]
    %v74 = vld [vmem:[#allocation5 + $0x78] sm:$0xff]
    %v75 = vld [vmem:[#allocation5 + $0x80] sm:$0xff]
    %v76 = vld [vmem:[#allocation5 + $0x88] sm:$0xff]
    %v77 = vld [vmem:[#allocation5 + $0x90] sm:$0xff]
    %v78 = vld [vmem:[#allocation5 + $0x98] sm:$0xff]
    %v79 = vld [vmem:[#allocation5 + $0xa0] sm:$0xff]
    %v80 = vld [vmem:[#allocation5 + $0xa8] sm:$0xff]
    %v81 = vld [vmem:[#allocation5 + $0xb0] sm:$0xff]
    %v82 = vld [vmem:[#allocation5 + $0xb8] sm:$0xff]
    %v83 = vld [vmem:[#allocation5 + $0xc0] sm:$0xff]
    %v84 = vld [vmem:[#allocation5 + $0xc8] sm:$0xff]
    %v85 = vld [vmem:[#allocation5 + $0xd0] sm:$0xff]
    %v86 = vld [vmem:[#allocation5 + $0xd8] sm:$0xff]
    %v87 = vld [vmem:[#allocation5 + $0xe0] sm:$0xff]
    %v88 = vld [vmem:[#allocation5 + $0xe8] sm:$0xff]
    %v89 = vld [vmem:[#allocation5 + $0xf0] sm:$0xff]
    %v90 = vld [vmem:[#allocation5 + $0xf8] sm:$0xff]
    %v91 = vld [vmem:[#allocation5 + $0x100] sm:$0xff]
    %v92 = vld [vmem:[#allocation5 + $0x108] sm:$0xff]
    %v93 = vld [vmem:[#allocation5 + $0x110] sm:$0xff]
    %v94 = vld [vmem:[#allocation5 + $0x118] sm:$0xff]
    %v95 = vld [vmem:[#allocation5 + $0x120] sm:$0xff]
    %v96 = vld [vmem:[#allocation5 + $0x128] sm:$0xff]
    %v97 = vld [vmem:[#allocation5 + $0x130] sm:$0xff]
    %v98 = vld [vmem:[#allocation5 + $0x138] sm:$0xff]
    %v99 = vld [vmem:[#allocation5 + $0x140] sm:$0xff]
    %v100 = vld [vmem:[#allocation5 + $0x148] sm:$0xff]
    %v101 = vld [vmem:[#allocation5 + $0x150] sm:$0xff]
    %v102 = vld [vmem:[#allocation5 + $0x158] sm:$0xff]
    %v103 = vld [vmem:[#allocation5 + $0x160] sm:$0xff]
    %v104 = vld [vmem:[#allocation5 + $0x168] sm:$0xff]
    %v105 = vld [vmem:[#allocation5 + $0x170] sm:$0xff]
    %v106 = vld [vmem:[#allocation5 + $0x178] sm:$0xff]
    %v107 = vld [vmem:[#allocation5 + $0x180] sm:$0xff]
    %v108 = vld [vmem:[#allocation5 + $0x188] sm:$0xff]
    %v109 = vld [vmem:[#allocation5 + $0x190] sm:$0xff]
    %v110 = vld [vmem:[#allocation5 + $0x198] sm:$0xff]
    %v111 = vld [vmem:[#allocation5 + $0x1a0] sm:$0xff]
    %v112 = vld [vmem:[#allocation5 + $0x1a8] sm:$0xff]
    %v113 = vld [vmem:[#allocation5 + $0x1b0] sm:$0xff]
    %v114 = vld [vmem:[#allocation5 + $0x1b8] sm:$0xff]
    %v115 = vld [vmem:[#allocation5 + $0x1c0] sm:$0xff]
    %v116 = vld [vmem:[#allocation5 + $0x1c8] sm:$0xff]
    %v117 = vld [vmem:[#allocation5 + $0x1d0] sm:$0xff]
    %v118 = vld [vmem:[#allocation5 + $0x1d8] sm:$0xff]
    %v119 = vld [vmem:[#allocation5 + $0x1e0] sm:$0xff]
    %v120 = vld [vmem:[#allocation5 + $0x1e8] sm:$0xff]
    %v121 = vld [vmem:[#allocation5 + $0x1f0] sm:$0xff]
    %v122 = vld [vmem:[#allocation5 + $0x1f8] sm:$0xff]
    %v123 = vld [vmem:[#allocation5 + $0x200] sm:$0xff]
    %v124 = vld [vmem:[#allocation5 + $0x208] sm:$0xff]
    %v125 = vld [vmem:[#allocation5 + $0x210] sm:$0xff]
    %v126 = vld [vmem:[#allocation5 + $0x218] sm:$0xff]
    %v127 = vld [vmem:[#allocation5 + $0x220] sm:$0xff]
    %v128 = vld [vmem:[#allocation5 + $0x228] sm:$0xff]
    %v129 = vld [vmem:[#allocation5 + $0x230] sm:$0xff]
    %v130 = vld [vmem:[#allocation5 + $0x238] sm:$0xff]
    %v131 = vld [vmem:[#allocation5 + $0x240] sm:$0xff]
    %v132 = vld [vmem:[#allocation5 + $0x248] sm:$0xff]
    %v133 = vld [vmem:[#allocation5 + $0x250] sm:$0xff]
    %v134 = vld [vmem:[#allocation5 + $0x258] sm:$0xff]
    %v135 = vld [vmem:[#allocation5 + $0x260] sm:$0xff]
    %v136 = vld [vmem:[#allocation5 + $0x268] sm:$0xff]
    %v137 = vld [vmem:[#allocation5 + $0x270] sm:$0xff]
    %v138 = vld [vmem:[#allocation5 + $0x278] sm:$0xff]
    %v139 = vld [vmem:[#allocation5 + $0x280] sm:$0xff]
    %v140 = vld [vmem:[#allocation5 + $0x288] sm:$0xff]
    %v141 = vld [vmem:[#allocation5 + $0x290] sm:$0xff]
    %v142 = vld [vmem:[#allocation5 + $0x298] sm:$0xff]
    %v143 = vld [vmem:[#allocation5 + $0x2a0] sm:$0xff]
    %v144 = vld [vmem:[#allocation5 + $0x2a8] sm:$0xff]
    %v145 = vld [vmem:[#allocation5 + $0x2b0] sm:$0xff]
    %v146 = vld [vmem:[#allocation5 + $0x2b8] sm:$0xff]
    %v147 = vld [vmem:[#allocation5 + $0x2c0] sm:$0xff]
    %v148 = vld [vmem:[#allocation5 + $0x2c8] sm:$0xff]
    %v149 = vld [vmem:[#allocation5 + $0x2d0] sm:$0xff]
    %v150 = vld [vmem:[#allocation5 + $0x2d8] sm:$0xff]
    %v151 = vld [vmem:[#allocation5 + $0x2e0] sm:$0xff]
    %v152 = vld [vmem:[#allocation5 + $0x2e8] sm:$0xff]
    %v153 = vld [vmem:[#allocation5 + $0x2f0] sm:$0xff]
    %v154 = vld [vmem:[#allocation5 + $0x2f8] sm:$0xff]
    %v155 = vld [vmem:[#allocation5 + $0x300] sm:$0xff]
    %v156 = vld [vmem:[#allocation5 + $0x308] sm:$0xff]
    %v157 = vld [vmem:[#allocation5 + $0x310] sm:$0xff]
    %v158 = vld [vmem:[#allocation5 + $0x318] sm:$0xff]
    %v159 = vld [vmem:[#allocation5 + $0x320] sm:$0xff]
    %v160 = vld [vmem:[#allocation5 + $0x328] sm:$0xff]
    %v161 = vld [vmem:[#allocation5 + $0x330] sm:$0xff]
    %v162 = vld [vmem:[#allocation5 + $0x338] sm:$0xff]
    %v163 = vld [vmem:[#allocation5 + $0x340] sm:$0xff]
    %v164 = vld [vmem:[#allocation5 + $0x348] sm:$0xff]
    %v165 = vld [vmem:[#allocation5 + $0x350] sm:$0xff]
    %v166 = vld [vmem:[#allocation5 + $0x358] sm:$0xff]
    %v167 = vld [vmem:[#allocation5 + $0x360] sm:$0xff]
    %v168 = vld [vmem:[#allocation5 + $0x368] sm:$0xff]
    %v169 = vld [vmem:[#allocation5 + $0x370] sm:$0xff]
    %v170 = vld [vmem:[#allocation5 + $0x378] sm:$0xff]
    %v171 = vld [vmem:[#allocation5 + $0x380] sm:$0xff]
    %v172 = vld [vmem:[#allocation5 + $0x388] sm:$0xff]
    %v173 = vld [vmem:[#allocation5 + $0x390] sm:$0xff]
    %v174 = vld [vmem:[#allocation5 + $0x398] sm:$0xff]
    %v175 = vld [vmem:[#allocation5 + $0x3a0] sm:$0xff]
    %v176 = vld [vmem:[#allocation5 + $0x3a8] sm:$0xff]
    %v177 = vld [vmem:[#allocation5 + $0x3b0] sm:$0xff]
    %v178 = vld [vmem:[#allocation5 + $0x3b8] sm:$0xff]
    %v179 = vld [vmem:[#allocation5 + $0x3c0] sm:$0xff]
    %v180 = vld [vmem:[#allocation5 + $0x3c8] sm:$0xff]
    %v181 = vld [vmem:[#allocation5 + $0x3d0] sm:$0xff]
    %v182 = vld [vmem:[#allocation5 + $0x3d8] sm:$0xff]
    %v183 = vld [vmem:[#allocation5 + $0x3e0] sm:$0xff]
    %v184 = vld [vmem:[#allocation5 + $0x3e8] sm:$0xff]
    %v185 = vld [vmem:[#allocation5 + $0x3f0] sm:$0xff]
    %v186 = vld [vmem:[#allocation5 + $0x3f8] sm:$0xff]
    %v187 = vld [vmem:[#allocation7] sm:$0x3]
    %v189 = vperm.slane %v187, 0
    %v190 = vperm.slane %v187, 1
    %194 = vst [vmem:[#allocation1] ss:$9 sm:$0xff] %v58
    %v195 = vld [vmem:[#allocation1] sm:$0xff]
    %v196 = vld [vmem:[#allocation1 + $0x9] sm:$0xff]
    %v197 = vld [vmem:[#allocation1 + $0x12] sm:$0xff]
    %v198 = vld [vmem:[#allocation1 + $0x1b] sm:$0xff]
    %v199 = vld [vmem:[#allocation1 + $0x24] sm:$0xff]
    %v200 = vld [vmem:[#allocation1 + $0x2d] sm:$0xff]
    %v201 = vld [vmem:[#allocation1 + $0x36] sm:$0xff]
    %v202 = vld [vmem:[#allocation1 + $0x3f] sm:$0xff]
    %v339 = vunpack.c.l.b16 %v59
    %v340 = vunpack.c.h.b16 %v59
    %v341 = vunpack.c.l.b16 %v60
    %v342 = vunpack.c.h.b16 %v60
    %v343 = vunpack.c.l.b16 %v61
    %v344 = vunpack.c.h.b16 %v61
    %v345 = vunpack.c.l.b16 %v62
    %v346 = vunpack.c.h.b16 %v62
    %v347 = vunpack.c.l.b16 %v63
    %v348 = vunpack.c.h.b16 %v63
    %v349 = vunpack.c.l.b16 %v64
    %v350 = vunpack.c.h.b16 %v64
    %v351 = vunpack.c.l.b16 %v65
    %v352 = vunpack.c.h.b16 %v65
    %v353 = vunpack.c.l.b16 %v66
    %v354 = vunpack.c.h.b16 %v66
    %v355 = vunpack.c.l.b16 %v67
    %v356 = vunpack.c.h.b16 %v67
    %v357 = vunpack.c.l.b16 %v68
    %v358 = vunpack.c.h.b16 %v68
    %v359 = vunpack.c.l.b16 %v69
    %v360 = vunpack.c.h.b16 %v69
    %v361 = vunpack.c.l.b16 %v70
    %v362 = vunpack.c.h.b16 %v70
    %v363 = vunpack.c.l.b16 %v71
    %v364 = vunpack.c.h.b16 %v71
    %v365 = vunpack.c.l.b16 %v72
    %v366 = vunpack.c.h.b16 %v72
    %v367 = vunpack.c.l.b16 %v73
    %v368 = vunpack.c.h.b16 %v73
    %v369 = vunpack.c.l.b16 %v74
    %v370 = vunpack.c.h.b16 %v74
    %v371 = vunpack.c.l.b16 %v75
    %v372 = vunpack.c.h.b16 %v75
    %v373 = vunpack.c.l.b16 %v76
    %v374 = vunpack.c.h.b16 %v76
    %v375 = vunpack.c.l.b16 %v77
    %v376 = vunpack.c.h.b16 %v77
    %v377 = vunpack.c.l.b16 %v78
    %v378 = vunpack.c.h.b16 %v78
    %v379 = vunpack.c.l.b16 %v79
    %v380 = vunpack.c.h.b16 %v79
    %v381 = vunpack.c.l.b16 %v80
    %v382 = vunpack.c.h.b16 %v80
    %v383 = vunpack.c.l.b16 %v81
    %v384 = vunpack.c.h.b16 %v81
    %v385 = vunpack.c.l.b16 %v82
    %v386 = vunpack.c.h.b16 %v82
    %v387 = vunpack.c.l.b16 %v83
    %v388 = vunpack.c.h.b16 %v83
    %v389 = vunpack.c.l.b16 %v84
    %v390 = vunpack.c.h.b16 %v84
    %v391 = vunpack.c.l.b16 %v85
    %v392 = vunpack.c.h.b16 %v85
    %v393 = vunpack.c.l.b16 %v86
    %v394 = vunpack.c.h.b16 %v86
    %v395 = vunpack.c.l.b16 %v87
    %v396 = vunpack.c.h.b16 %v87
    %v397 = vunpack.c.l.b16 %v88
    %v398 = vunpack.c.h.b16 %v88
    %v399 = vunpack.c.l.b16 %v89
    %v400 = vunpack.c.h.b16 %v89
    %v401 = vunpack.c.l.b16 %v90
    %v402 = vunpack.c.h.b16 %v90
    %v403 = vunpack.c.l.b16 %v91
    %v404 = vunpack.c.h.b16 %v91
    %v405 = vunpack.c.l.b16 %v92
    %v406 = vunpack.c.h.b16 %v92
    %v407 = vunpack.c.l.b16 %v93
    %v408 = vunpack.c.h.b16 %v93
    %v409 = vunpack.c.l.b16 %v94
    %v410 = vunpack.c.h.b16 %v94
    %v411 = vunpack.c.l.b16 %v95
    %v412 = vunpack.c.h.b16 %v95
    %v413 = vunpack.c.l.b16 %v96
    %v414 = vunpack.c.h.b16 %v96
    %v415 = vunpack.c.l.b16 %v97
    %v416 = vunpack.c.h.b16 %v97
    %v417 = vunpack.c.l.b16 %v98
    %v418 = vunpack.c.h.b16 %v98
    %v419 = vunpack.c.l.b16 %v99
    %v420 = vunpack.c.h.b16 %v99
    %v421 = vunpack.c.l.b16 %v100
    %v422 = vunpack.c.h.b16 %v100
    %v423 = vunpack.c.l.b16 %v101
    %v424 = vunpack.c.h.b16 %v101
    %v425 = vunpack.c.l.b16 %v102
    %v426 = vunpack.c.h.b16 %v102
    %v427 = vunpack.c.l.b16 %v103
    %v428 = vunpack.c.h.b16 %v103
    %v429 = vunpack.c.l.b16 %v104
    %v430 = vunpack.c.h.b16 %v104
    %v431 = vunpack.c.l.b16 %v105
    %v432 = vunpack.c.h.b16 %v105
    %v433 = vunpack.c.l.b16 %v106
    %v434 = vunpack.c.h.b16 %v106
    %v435 = vunpack.c.l.b16 %v107
    %v436 = vunpack.c.h.b16 %v107
    %v437 = vunpack.c.l.b16 %v108
    %v438 = vunpack.c.h.b16 %v108
    %v439 = vunpack.c.l.b16 %v109
    %v440 = vunpack.c.h.b16 %v109
    %v441 = vunpack.c.l.b16 %v110
    %v442 = vunpack.c.h.b16 %v110
    %v443 = vunpack.c.l.b16 %v111
    %v444 = vunpack.c.h.b16 %v111
    %v445 = vunpack.c.l.b16 %v112
    %v446 = vunpack.c.h.b16 %v112
    %v447 = vunpack.c.l.b16 %v113
    %v448 = vunpack.c.h.b16 %v113
    %v449 = vunpack.c.l.b16 %v114
    %v450 = vunpack.c.h.b16 %v114
    %v451 = vunpack.c.l.b16 %v115
    %v452 = vunpack.c.h.b16 %v115
    %v453 = vunpack.c.l.b16 %v116
    %v454 = vunpack.c.h.b16 %v116
    %v455 = vunpack.c.l.b16 %v117
    %v456 = vunpack.c.h.b16 %v117
    %v457 = vunpack.c.l.b16 %v118
    %v458 = vunpack.c.h.b16 %v118
    %v459 = vunpack.c.l.b16 %v119
    %v460 = vunpack.c.h.b16 %v119
    %v461 = vunpack.c.l.b16 %v120
    %v462 = vunpack.c.h.b16 %v120
    %v463 = vunpack.c.l.b16 %v121
    %v464 = vunpack.c.h.b16 %v121
    %v465 = vunpack.c.l.b16 %v122
    %v466 = vunpack.c.h.b16 %v122
    %v467 = vunpack.c.l.b16 %v123
    %v468 = vunpack.c.h.b16 %v123
    %v469 = vunpack.c.l.b16 %v124
    %v470 = vunpack.c.h.b16 %v124
    %v471 = vunpack.c.l.b16 %v125
    %v472 = vunpack.c.h.b16 %v125
    %v473 = vunpack.c.l.b16 %v126
    %v474 = vunpack.c.h.b16 %v126
    %v475 = vunpack.c.l.b16 %v127
    %v476 = vunpack.c.h.b16 %v127
    %v477 = vunpack.c.l.b16 %v128
    %v478 = vunpack.c.h.b16 %v128
    %v479 = vunpack.c.l.b16 %v129
    %v480 = vunpack.c.h.b16 %v129
    %v481 = vunpack.c.l.b16 %v130
    %v482 = vunpack.c.h.b16 %v130
    %v483 = vunpack.c.l.b16 %v131
    %v484 = vunpack.c.h.b16 %v131
    %v485 = vunpack.c.l.b16 %v132
    %v486 = vunpack.c.h.b16 %v132
    %v487 = vunpack.c.l.b16 %v133
    %v488 = vunpack.c.h.b16 %v133
    %v489 = vunpack.c.l.b16 %v134
    %v490 = vunpack.c.h.b16 %v134
    %v491 = vunpack.c.l.b16 %v135
    %v492 = vunpack.c.h.b16 %v135
    %v493 = vunpack.c.l.b16 %v136
    %v494 = vunpack.c.h.b16 %v136
    %v495 = vunpack.c.l.b16 %v137
    %v496 = vunpack.c.h.b16 %v137
    %v497 = vunpack.c.l.b16 %v138
    %v498 = vunpack.c.h.b16 %v138
    %v499 = vunpack.c.l.b16 %v139
    %v500 = vunpack.c.h.b16 %v139
    %v501 = vunpack.c.l.b16 %v140
    %v502 = vunpack.c.h.b16 %v140
    %v503 = vunpack.c.l.b16 %v141
    %v504 = vunpack.c.h.b16 %v141
    %v505 = vunpack.c.l.b16 %v142
    %v506 = vunpack.c.h.b16 %v142
    %v507 = vunpack.c.l.b16 %v143
    %v508 = vunpack.c.h.b16 %v143
    %v509 = vunpack.c.l.b16 %v144
    %v510 = vunpack.c.h.b16 %v144
    %v511 = vunpack.c.l.b16 %v145
    %v512 = vunpack.c.h.b16 %v145
    %v513 = vunpack.c.l.b16 %v146
    %v514 = vunpack.c.h.b16 %v146
    %v515 = vunpack.c.l.b16 %v147
    %v516 = vunpack.c.h.b16 %v147
    %v517 = vunpack.c.l.b16 %v148
    %v518 = vunpack.c.h.b16 %v148
    %v519 = vunpack.c.l.b16 %v149
    %v520 = vunpack.c.h.b16 %v149
    %v521 = vunpack.c.l.b16 %v150
    %v522 = vunpack.c.h.b16 %v150
    %v523 = vunpack.c.l.b16 %v151
    %v524 = vunpack.c.h.b16 %v151
    %v525 = vunpack.c.l.b16 %v152
    %v526 = vunpack.c.h.b16 %v152
    %v527 = vunpack.c.l.b16 %v153
    %v528 = vunpack.c.h.b16 %v153
    %v529 = vunpack.c.l.b16 %v154
    %v530 = vunpack.c.h.b16 %v154
    %v531 = vunpack.c.l.b16 %v155
    %v532 = vunpack.c.h.b16 %v155
    %v533 = vunpack.c.l.b16 %v156
    %v534 = vunpack.c.h.b16 %v156
    %v535 = vunpack.c.l.b16 %v157
    %v536 = vunpack.c.h.b16 %v157
    %v537 = vunpack.c.l.b16 %v158
    %v538 = vunpack.c.h.b16 %v158
    %v539 = vunpack.c.l.b16 %v159
    %v540 = vunpack.c.h.b16 %v159
    %v541 = vunpack.c.l.b16 %v160
    %v542 = vunpack.c.h.b16 %v160
    %v543 = vunpack.c.l.b16 %v161
    %v544 = vunpack.c.h.b16 %v161
    %v545 = vunpack.c.l.b16 %v162
    %v546 = vunpack.c.h.b16 %v162
    %v547 = vunpack.c.l.b16 %v163
    %v548 = vunpack.c.h.b16 %v163
    %v549 = vunpack.c.l.b16 %v164
    %v550 = vunpack.c.h.b16 %v164
    %v551 = vunpack.c.l.b16 %v165
    %v552 = vunpack.c.h.b16 %v165
    %v553 = vunpack.c.l.b16 %v166
    %v554 = vunpack.c.h.b16 %v166
    %v555 = vunpack.c.l.b16 %v167
    %v556 = vunpack.c.h.b16 %v167
    %v557 = vunpack.c.l.b16 %v168
    %v558 = vunpack.c.h.b16 %v168
    %v559 = vunpack.c.l.b16 %v169
    %v560 = vunpack.c.h.b16 %v169
    %v561 = vunpack.c.l.b16 %v170
    %v562 = vunpack.c.h.b16 %v170
    %v563 = vunpack.c.l.b16 %v171
    %v564 = vunpack.c.h.b16 %v171
    %v565 = vunpack.c.l.b16 %v172
    %v566 = vunpack.c.h.b16 %v172
    %v567 = vunpack.c.l.b16 %v173
    %v568 = vunpack.c.h.b16 %v173
    %v569 = vunpack.c.l.b16 %v174
    %v570 = vunpack.c.h.b16 %v174
    %v571 = vunpack.c.l.b16 %v175
    %v572 = vunpack.c.h.b16 %v175
    %v573 = vunpack.c.l.b16 %v176
    %v574 = vunpack.c.h.b16 %v176
    %v575 = vunpack.c.l.b16 %v177
    %v576 = vunpack.c.h.b16 %v177
    %v577 = vunpack.c.l.b16 %v178
    %v578 = vunpack.c.h.b16 %v178
    %v579 = vunpack.c.l.b16 %v179
    %v580 = vunpack.c.h.b16 %v179
    %v581 = vunpack.c.l.b16 %v180
    %v582 = vunpack.c.h.b16 %v180
    %v583 = vunpack.c.l.b16 %v181
    %v584 = vunpack.c.h.b16 %v181
    %v585 = vunpack.c.l.b16 %v182
    %v586 = vunpack.c.h.b16 %v182
    %v587 = vunpack.c.l.b16 %v183
    %v588 = vunpack.c.h.b16 %v183
    %v589 = vunpack.c.l.b16 %v184
    %v590 = vunpack.c.h.b16 %v184
    %v591 = vunpack.c.l.b16 %v185
    %v592 = vunpack.c.h.b16 %v185
    %v593 = vunpack.c.l.b16 %v186
    %v594 = vunpack.c.h.b16 %v186
    %v595 = vpack.c.b16 %v341, %v339
    %v596 = vpack.c.b16 %v342, %v340
    %v597 = vpack.c.b16 %v345, %v343
    %v598 = vpack.c.b16 %v346, %v344
    %v599 = vpack.c.b16 %v349, %v347
    %v600 = vpack.c.b16 %v350, %v348
    %v601 = vpack.c.b16 %v353, %v351
    %v602 = vpack.c.b16 %v354, %v352
    %v603 = vpack.c.b16 %v357, %v355
    %v604 = vpack.c.b16 %v358, %v356
    %v605 = vpack.c.b16 %v361, %v359
    %v606 = vpack.c.b16 %v362, %v360
    %v607 = vpack.c.b16 %v365, %v363
    %v608 = vpack.c.b16 %v366, %v364
    %v609 = vpack.c.b16 %v369, %v367
    %v610 = vpack.c.b16 %v370, %v368
    %v611 = vpack.c.b16 %v373, %v371
    %v612 = vpack.c.b16 %v374, %v372
    %v613 = vpack.c.b16 %v377, %v375
    %v614 = vpack.c.b16 %v378, %v376
    %v615 = vpack.c.b16 %v381, %v379
    %v616 = vpack.c.b16 %v382, %v380
    %v617 = vpack.c.b16 %v385, %v383
    %v618 = vpack.c.b16 %v386, %v384
    %v619 = vpack.c.b16 %v389, %v387
    %v620 = vpack.c.b16 %v390, %v388
    %v621 = vpack.c.b16 %v393, %v391
    %v622 = vpack.c.b16 %v394, %v392
    %v623 = vpack.c.b16 %v397, %v395
    %v624 = vpack.c.b16 %v398, %v396
    %v625 = vpack.c.b16 %v401, %v399
    %v626 = vpack.c.b16 %v402, %v400
    %v627 = vpack.c.b16 %v405, %v403
    %v628 = vpack.c.b16 %v406, %v404
    %v629 = vpack.c.b16 %v409, %v407
    %v630 = vpack.c.b16 %v410, %v408
    %v631 = vpack.c.b16 %v413, %v411
    %v632 = vpack.c.b16 %v414, %v412
    %v633 = vpack.c.b16 %v417, %v415
    %v634 = vpack.c.b16 %v418, %v416
    %v635 = vpack.c.b16 %v421, %v419
    %v636 = vpack.c.b16 %v422, %v420
    %v637 = vpack.c.b16 %v425, %v423
    %v638 = vpack.c.b16 %v426, %v424
    %v639 = vpack.c.b16 %v429, %v427
    %v640 = vpack.c.b16 %v430, %v428
    %v641 = vpack.c.b16 %v433, %v431
    %v642 = vpack.c.b16 %v434, %v432
    %v643 = vpack.c.b16 %v437, %v435
    %v644 = vpack.c.b16 %v438, %v436
    %v645 = vpack.c.b16 %v441, %v439
    %v646 = vpack.c.b16 %v442, %v440
    %v647 = vpack.c.b16 %v445, %v443
    %v648 = vpack.c.b16 %v446, %v444
    %v649 = vpack.c.b16 %v449, %v447
    %v650 = vpack.c.b16 %v450, %v448
    %v651 = vpack.c.b16 %v453, %v451
    %v652 = vpack.c.b16 %v454, %v452
    %v653 = vpack.c.b16 %v457, %v455
    %v654 = vpack.c.b16 %v458, %v456
    %v655 = vpack.c.b16 %v461, %v459
    %v656 = vpack.c.b16 %v462, %v460
    %v657 = vpack.c.b16 %v465, %v463
    %v658 = vpack.c.b16 %v466, %v464
    %v659 = vpack.c.b16 %v469, %v467
    %v660 = vpack.c.b16 %v470, %v468
    %v661 = vpack.c.b16 %v473, %v471
    %v662 = vpack.c.b16 %v474, %v472
    %v663 = vpack.c.b16 %v477, %v475
    %v664 = vpack.c.b16 %v478, %v476
    %v665 = vpack.c.b16 %v481, %v479
    %v666 = vpack.c.b16 %v482, %v480
    %v667 = vpack.c.b16 %v485, %v483
    %v668 = vpack.c.b16 %v486, %v484
    %v669 = vpack.c.b16 %v489, %v487
    %v670 = vpack.c.b16 %v490, %v488
    %v671 = vpack.c.b16 %v493, %v491
    %v672 = vpack.c.b16 %v494, %v492
    %v673 = vpack.c.b16 %v497, %v495
    %v674 = vpack.c.b16 %v498, %v496
    %v675 = vpack.c.b16 %v501, %v499
    %v676 = vpack.c.b16 %v502, %v500
    %v677 = vpack.c.b16 %v505, %v503
    %v678 = vpack.c.b16 %v506, %v504
    %v679 = vpack.c.b16 %v509, %v507
    %v680 = vpack.c.b16 %v510, %v508
    %v681 = vpack.c.b16 %v513, %v511
    %v682 = vpack.c.b16 %v514, %v512
    %v683 = vpack.c.b16 %v517, %v515
    %v684 = vpack.c.b16 %v518, %v516
    %v685 = vpack.c.b16 %v521, %v519
    %v686 = vpack.c.b16 %v522, %v520
    %v687 = vpack.c.b16 %v525, %v523
    %v688 = vpack.c.b16 %v526, %v524
    %v689 = vpack.c.b16 %v529, %v527
    %v690 = vpack.c.b16 %v530, %v528
    %v691 = vpack.c.b16 %v533, %v531
    %v692 = vpack.c.b16 %v534, %v532
    %v693 = vpack.c.b16 %v537, %v535
    %v694 = vpack.c.b16 %v538, %v536
    %v695 = vpack.c.b16 %v541, %v539
    %v696 = vpack.c.b16 %v542, %v540
    %v697 = vpack.c.b16 %v545, %v543
    %v698 = vpack.c.b16 %v546, %v544
    %v699 = vpack.c.b16 %v549, %v547
    %v700 = vpack.c.b16 %v550, %v548
    %v701 = vpack.c.b16 %v553, %v551
    %v702 = vpack.c.b16 %v554, %v552
    %v703 = vpack.c.b16 %v557, %v555
    %v704 = vpack.c.b16 %v558, %v556
    %v705 = vpack.c.b16 %v561, %v559
    %v706 = vpack.c.b16 %v562, %v560
    %v707 = vpack.c.b16 %v565, %v563
    %v708 = vpack.c.b16 %v566, %v564
    %v709 = vpack.c.b16 %v569, %v567
    %v710 = vpack.c.b16 %v570, %v568
    %v711 = vpack.c.b16 %v573, %v571
    %v712 = vpack.c.b16 %v574, %v572
    %v713 = vpack.c.b16 %v577, %v575
    %v714 = vpack.c.b16 %v578, %v576
    %v715 = vpack.c.b16 %v581, %v579
    %v716 = vpack.c.b16 %v582, %v580
    %v717 = vpack.c.b16 %v585, %v583
    %v718 = vpack.c.b16 %v586, %v584
    %v719 = vpack.c.b16 %v589, %v587
    %v720 = vpack.c.b16 %v590, %v588
    %v721 = vpack.c.b16 %v593, %v591
    %v722 = vpack.c.b16 %v594, %v592
    %851 = vmatpush.bf16.msra.mxu0 %v609
    %852 = vmatpush.bf16.msra.mxu0 %v607
    %853 = vmatpush.bf16.msra.mxu0 %v605
    %854 = vmatpush.bf16.msra.mxu0 %v603
    %855 = vmatpush.bf16.msra.mxu0 %v601
    %856 = vmatpush.bf16.msra.mxu0 %v599
    %857 = vmatpush.bf16.msra.mxu0 %v597
    %858 = vmatpush.bf16.msra.mxu0 %v595
    %859 = vmatmul.bf16.gmra.mxu0 %v195
    %v860 = vpop.f32.mrf.mxu0
    %v861 = vadd.f32 %v189, %v860
    %v862 = vpop.f32.mrf.mxu0
    %863 = vdwg.mxu0
    %864 = vmatpush.bf16.msra.mxu0 %v625
    %865 = vmatpush.bf16.msra.mxu0 %v623
    %866 = vmatpush.bf16.msra.mxu0 %v621
    %867 = vmatpush.bf16.msra.mxu0 %v619
    %868 = vmatpush.bf16.msra.mxu0 %v617
    %869 = vmatpush.bf16.msra.mxu0 %v615
    %870 = vmatpush.bf16.msra.mxu0 %v613
    %871 = vmatpush.bf16.msra.mxu0 %v611
    %872 = vmatmul.bf16.gmra.mxu0 %v196
    %v873 = vpop.f32.mrf.mxu0
    %v874 = vadd.f32 %v861, %v873
    %v875 = vpop.f32.mrf.mxu0
    %876 = vdwg.mxu0
    %877 = vmatpush.bf16.msra.mxu0 %v641
    %878 = vmatpush.bf16.msra.mxu0 %v639
    %879 = vmatpush.bf16.msra.mxu0 %v637
    %880 = vmatpush.bf16.msra.mxu0 %v635
    %881 = vmatpush.bf16.msra.mxu0 %v633
    %882 = vmatpush.bf16.msra.mxu0 %v631
    %883 = vmatpush.bf16.msra.mxu0 %v629
    %884 = vmatpush.bf16.msra.mxu0 %v627
    %885 = vmatmul.bf16.gmra.mxu0 %v197
    %v886 = vpop.f32.mrf.mxu0
    %v887 = vadd.f32 %v874, %v886
    %v888 = vpop.f32.mrf.mxu0
    %889 = vdwg.mxu0
    %890 = vmatpush.bf16.msra.mxu0 %v657
    %891 = vmatpush.bf16.msra.mxu0 %v655
    %892 = vmatpush.bf16.msra.mxu0 %v653
    %893 = vmatpush.bf16.msra.mxu0 %v651
    %894 = vmatpush.bf16.msra.mxu0 %v649
    %895 = vmatpush.bf16.msra.mxu0 %v647
    %896 = vmatpush.bf16.msra.mxu0 %v645
    %897 = vmatpush.bf16.msra.mxu0 %v643
    %898 = vmatmul.bf16.gmra.mxu0 %v198
    %v899 = vpop.f32.mrf.mxu0
    %v900 = vadd.f32 %v887, %v899
    %v901 = vpop.f32.mrf.mxu0
    %902 = vdwg.mxu0
    %903 = vmatpush.bf16.msra.mxu0 %v673
    %904 = vmatpush.bf16.msra.mxu0 %v671
    %905 = vmatpush.bf16.msra.mxu0 %v669
    %906 = vmatpush.bf16.msra.mxu0 %v667
    %907 = vmatpush.bf16.msra.mxu0 %v665
    %908 = vmatpush.bf16.msra.mxu0 %v663
    %909 = vmatpush.bf16.msra.mxu0 %v661
    %910 = vmatpush.bf16.msra.mxu0 %v659
    %911 = vmatmul.bf16.gmra.mxu0 %v199
    %v912 = vpop.f32.mrf.mxu0
    %v913 = vadd.f32 %v900, %v912
    %v914 = vpop.f32.mrf.mxu0
    %915 = vdwg.mxu0
    %916 = vmatpush.bf16.msra.mxu0 %v689
    %917 = vmatpush.bf16.msra.mxu0 %v687
    %918 = vmatpush.bf16.msra.mxu0 %v685
    %919 = vmatpush.bf16.msra.mxu0 %v683
    %920 = vmatpush.bf16.msra.mxu0 %v681
    %921 = vmatpush.bf16.msra.mxu0 %v679
    %922 = vmatpush.bf16.msra.mxu0 %v677
    %923 = vmatpush.bf16.msra.mxu0 %v675
    %924 = vmatmul.bf16.gmra.mxu0 %v200
    %v925 = vpop.f32.mrf.mxu0
    %v926 = vadd.f32 %v913, %v925
    %v927 = vpop.f32.mrf.mxu0
    %928 = vdwg.mxu0
    %929 = vmatpush.bf16.msra.mxu0 %v705
    %930 = vmatpush.bf16.msra.mxu0 %v703
    %931 = vmatpush.bf16.msra.mxu0 %v701
    %932 = vmatpush.bf16.msra.mxu0 %v699
    %933 = vmatpush.bf16.msra.mxu0 %v697
    %934 = vmatpush.bf16.msra.mxu0 %v695
    %935 = vmatpush.bf16.msra.mxu0 %v693
    %936 = vmatpush.bf16.msra.mxu0 %v691
    %937 = vmatmul.bf16.gmra.mxu0 %v201
    %v938 = vpop.f32.mrf.mxu0
    %v939 = vadd.f32 %v926, %v938
    %v940 = vpop.f32.mrf.mxu0
    %941 = vdwg.mxu0
    %942 = vmatpush.bf16.msra.mxu0 %v721
    %943 = vmatpush.bf16.msra.mxu0 %v719
    %944 = vmatpush.bf16.msra.mxu0 %v717
    %945 = vmatpush.bf16.msra.mxu0 %v715
    %946 = vmatpush.bf16.msra.mxu0 %v713
    %947 = vmatpush.bf16.msra.mxu0 %v711
    %948 = vmatpush.bf16.msra.mxu0 %v709
    %949 = vmatpush.bf16.msra.mxu0 %v707
    %950 = vmatmul.bf16.gmra.mxu0 %v202
    %v951 = vpop.f32.mrf.mxu0
    %v952 = vadd.f32 %v939, %v951
    %v953 = vpop.f32.mrf.mxu0
    %954 = vdwg.mxu0
    %955 = vmatpush.bf16.msra.mxu0 %v610
    %956 = vmatpush.bf16.msra.mxu0 %v608
    %957 = vmatpush.bf16.msra.mxu0 %v606
    %958 = vmatpush.bf16.msra.mxu0 %v604
    %959 = vmatpush.bf16.msra.mxu0 %v602
    %960 = vmatpush.bf16.msra.mxu0 %v600
    %961 = vmatpush.bf16.msra.mxu0 %v598
    %962 = vmatpush.bf16.msra.mxu0 %v596
    %963 = vmatmul.bf16.gmra.mxu0 %v195
    %v964 = vpop.f32.mrf.mxu0
    %v965 = vadd.f32 %v190, %v964
    %v966 = vpop.f32.mrf.mxu0
    %967 = vdwg.mxu0
    %968 = vmatpush.bf16.msra.mxu0 %v626
    %969 = vmatpush.bf16.msra.mxu0 %v624
    %970 = vmatpush.bf16.msra.mxu0 %v622
    %971 = vmatpush.bf16.msra.mxu0 %v620
    %972 = vmatpush.bf16.msra.mxu0 %v618
    %973 = vmatpush.bf16.msra.mxu0 %v616
    %974 = vmatpush.bf16.msra.mxu0 %v614
    %975 = vmatpush.bf16.msra.mxu0 %v612
    %976 = vmatmul.bf16.gmra.mxu0 %v196
    %v977 = vpop.f32.mrf.mxu0
    %v978 = vadd.f32 %v965, %v977
    %v979 = vpop.f32.mrf.mxu0
    %980 = vdwg.mxu0
    %981 = vmatpush.bf16.msra.mxu0 %v642
    %982 = vmatpush.bf16.msra.mxu0 %v640
    %983 = vmatpush.bf16.msra.mxu0 %v638
    %984 = vmatpush.bf16.msra.mxu0 %v636
    %985 = vmatpush.bf16.msra.mxu0 %v634
    %986 = vmatpush.bf16.msra.mxu0 %v632
    %987 = vmatpush.bf16.msra.mxu0 %v630
    %988 = vmatpush.bf16.msra.mxu0 %v628
    %989 = vmatmul.bf16.gmra.mxu0 %v197
    %v990 = vpop.f32.mrf.mxu0
    %v991 = vadd.f32 %v978, %v990
    %v992 = vpop.f32.mrf.mxu0
    %993 = vdwg.mxu0
    %994 = vmatpush.bf16.msra.mxu0 %v658
    %995 = vmatpush.bf16.msra.mxu0 %v656
    %996 = vmatpush.bf16.msra.mxu0 %v654
    %997 = vmatpush.bf16.msra.mxu0 %v652
    %998 = vmatpush.bf16.msra.mxu0 %v650
    %999 = vmatpush.bf16.msra.mxu0 %v648
    %1000 = vmatpush.bf16.msra.mxu0 %v646
    %1001 = vmatpush.bf16.msra.mxu0 %v644
    %1002 = vmatmul.bf16.gmra.mxu0 %v198
    %v1003 = vpop.f32.mrf.mxu0
    %v1004 = vadd.f32 %v991, %v1003
    %v1005 = vpop.f32.mrf.mxu0
    %1006 = vdwg.mxu0
    %1007 = vmatpush.bf16.msra.mxu0 %v674
    %1008 = vmatpush.bf16.msra.mxu0 %v672
    %1009 = vmatpush.bf16.msra.mxu0 %v670
    %1010 = vmatpush.bf16.msra.mxu0 %v668
    %1011 = vmatpush.bf16.msra.mxu0 %v666
    %1012 = vmatpush.bf16.msra.mxu0 %v664
    %1013 = vmatpush.bf16.msra.mxu0 %v662
    %1014 = vmatpush.bf16.msra.mxu0 %v660
    %1015 = vmatmul.bf16.gmra.mxu0 %v199
    %v1016 = vpop.f32.mrf.mxu0
    %v1017 = vadd.f32 %v1004, %v1016
    %v1018 = vpop.f32.mrf.mxu0
    %1019 = vdwg.mxu0
    %1020 = vmatpush.bf16.msra.mxu0 %v690
    %1021 = vmatpush.bf16.msra.mxu0 %v688
    %1022 = vmatpush.bf16.msra.mxu0 %v686
    %1023 = vmatpush.bf16.msra.mxu0 %v684
    %1024 = vmatpush.bf16.msra.mxu0 %v682
    %1025 = vmatpush.bf16.msra.mxu0 %v680
    %1026 = vmatpush.bf16.msra.mxu0 %v678
    %1027 = vmatpush.bf16.msra.mxu0 %v676
    %1028 = vmatmul.bf16.gmra.mxu0 %v200
    %v1029 = vpop.f32.mrf.mxu0
    %v1030 = vadd.f32 %v1017, %v1029
    %v1031 = vpop.f32.mrf.mxu0
    %1032 = vdwg.mxu0
    %1033 = vmatpush.bf16.msra.mxu0 %v706
    %1034 = vmatpush.bf16.msra.mxu0 %v704
    %1035 = vmatpush.bf16.msra.mxu0 %v702
    %1036 = vmatpush.bf16.msra.mxu0 %v700
    %1037 = vmatpush.bf16.msra.mxu0 %v698
    %1038 = vmatpush.bf16.msra.mxu0 %v696
    %1039 = vmatpush.bf16.msra.mxu0 %v694
    %1040 = vmatpush.bf16.msra.mxu0 %v692
    %1041 = vmatmul.bf16.gmra.mxu0 %v201
    %v1042 = vpop.f32.mrf.mxu0
    %v1043 = vadd.f32 %v1030, %v1042
    %v1044 = vpop.f32.mrf.mxu0
    %1045 = vdwg.mxu0
    %1046 = vmatpush.bf16.msra.mxu0 %v722
    %1047 = vmatpush.bf16.msra.mxu0 %v720
    %1048 = vmatpush.bf16.msra.mxu0 %v718
    %1049 = vmatpush.bf16.msra.mxu0 %v716
    %1050 = vmatpush.bf16.msra.mxu0 %v714
    %1051 = vmatpush.bf16.msra.mxu0 %v712
    %1052 = vmatpush.bf16.msra.mxu0 %v710
    %1053 = vmatpush.bf16.msra.mxu0 %v708
    %1054 = vmatmul.bf16.gmra.mxu0 %v202
    %v1055 = vpop.f32.mrf.mxu0
    %v1056 = vadd.f32 %v1043, %v1055
    %v1057 = vpop.f32.mrf.mxu0
    %1058 = vdwg.mxu0
    %v1059 = vlaneseq
    %v1060 = vand.u32 %v1059, 127
    %v1061 = vadd.s32 %v1060, 128
    %vm1062 = vcmp.lt.s32.totalorder %v1060, 128
    %vm1063 = vcmp.lt.s32.totalorder %v1061, 128
    %v1064 = vmax.f32 %v952, 0.0
    %v1065 = vmax.f32 %v1056, 0.0
    %v1066 = vsel %vm1062, %v1064, %v952
    %v1067 = vsel %vm1063, %v1065, %v1056
    %v1070 = vrot.slane %v1067, 6
    %vm1071 = vcmask 1041408
    %v1072 = vsel %vm1071, %v1066, %v1070
    %1074 = vst [vmem:[#allocation8] sm:$0xf] %v1072
    // Predicated region
    $region26: #{tpu_custom_call.1} parent=1 // pred_check
      _
    $region27: #{tpu_custom_call.1} parent=1 // pred_check_branch
      %1076 = sbr.rel (0) target = $region29
    $region28: #{tpu_custom_call.1} parent=1 // pred_region
      %1078 = vsyncadd [#allocation4], 0
      %s1080 = sshll.u32 [#allocation8], 4
      %s1081 = int_to_ptr.vmem [resolvable:$true] %s1080
      %s1082 = sshll.u32 %s3, 4
      %s1083 = int_to_ptr.hbm [resolvable:$true] %s1082
      %1085 = dma.vmem_to_hbm [thread:$0]  %s1081, 64, %s1083, [#allocation4]
    $region29: #{tpu_custom_call.1} parent=1 // pred_fallthru
      _
    // Predicated region
    $region30: #{tpu_custom_call.1} parent=1 // pred_check
      _
    $region31: #{tpu_custom_call.1} parent=1 // pred_check_branch
      %1087 = sbr.rel (0) target = $region33
    $region32: #{tpu_custom_call.1} parent=1 // pred_region
      %1089 = dma.done [#allocation4], 64
    $region33: #{tpu_custom_call.1} parent=1 // pred_fallthru
      _
    %1090 = vsyncpa [#allocation3], 1
    %1091 = vsyncpa [#allocation6], 1
    %1092 = vsyncpa [#allocation4], 1

</llo_original>
